<compile_context>
chip_gen: v7x
topology: tpu7x:2x2x1
jax: 0.10.0
libtpu: 0.0.40
codegen_flags: <defaults>
</compile_context>

<pallas_src>
import jax
import jax.numpy as jnp
from jax.experimental import pallas as pl
from jax.experimental.pallas import tpu as pltpu

# Small, module-consistent sizes (module defaults: input_target_size=640,
# hidden widths 512/256/128 fixed by the module, action dims configurable).
INPUT_TARGET_SIZE = 128      # shrunk from 640 for this synthetic run
H1, H2, H3 = 512, 256, 128   # fixed by the module definition
CONT_DIM = 4                 # continuous_action_dim
VM_DIM = 8                   # output_target_size['discrete']['VM_choice']
TASK_DIM = 16                # output_target_size['discrete']['task_index']
DISC_DIM = VM_DIM + TASK_DIM


def _round_up(n, m):
    return ((n + m - 1) // m) * m


def actor_critic_forward_kernel(
    x_ref,
    w1_ref, b1_ref, w2_ref, b2_ref,      # shared_layers
    wmid_ref, bmid_ref,                  # fused [continuous_mean_layer[0] | discrete_logits_layer[0]]
    wc2_ref, bc2_ref,                    # continuous_mean_layer[2]
    wh_ref, bh_ref,                      # fused [VM_choice_output | task_index_output]
    cont_ref, disc_ref,
):
    f32 = jnp.float32
    bf16 = jnp.bfloat16

    x = x_ref[...]                                                        # (TB, D) bf16

    # shared trunk: Linear(D,512) -> Tanh -> Linear(512,256) -> Tanh
    h1 = jnp.tanh(jnp.dot(x, w1_ref[...], preferred_element_type=f32) + b1_ref[...])
    h2 = jnp.tanh(jnp.dot(h1.astype(bf16), w2_ref[...], preferred_element_type=f32) + b2_ref[...])

    # fused 256->256 matmul = continuous 256->128 head + discrete 256->128 head
    mid = jnp.tanh(jnp.dot(h2.astype(bf16), wmid_ref[...], preferred_element_type=f32)
                   + bmid_ref[...])
    c1 = mid[:, :H3]          # continuous branch hidden (TB, 128)
    d1 = mid[:, H3:]          # discrete branch hidden   (TB, 128)

    # continuous head: Linear(128, CONT_DIM) -> Tanh
    cont_ref[...] = jnp.tanh(
        jnp.dot(c1.astype(bf16), wc2_ref[...], preferred_element_type=f32) + bc2_ref[...]
    )

    # fused discrete output heads: one 128 -> (VM_DIM + TASK_DIM) matmul
    logits = jnp.dot(d1.astype(bf16), wh_ref[...], preferred_element_type=f32) + bh_ref[...]

    def _softmax(z):
        m = jnp.max(z, axis=-1, keepdims=True)
        e = jnp.exp(z - m)
        return e / jnp.sum(e, axis=-1, keepdims=True)   # exact divide (sums == 1 to ~1e-7)

    vm_probs = _softmax(logits[:, :VM_DIM])
    ti_probs = _softmax(logits[:, VM_DIM:])
    # single lane-dense store instead of two masked slice stores
    disc_ref[...] = jnp.concatenate([vm_probs, ti_probs], axis=-1)


def actor_critic_forward(x, params, *, batch_tile=None):
    """x: (B, INPUT_TARGET_SIZE) padded state, f32. Returns (continuous_mean, discrete_probs)."""
    B, D = x.shape

    # Batch tile: multiple of 8 (f32/bf16 sublane), capped at 512 so per-step live
    # intermediates (~TB*512*4B + smaller) stay well under v7x's 64 MiB VMEM.
    if batch_tile is None:
        TB = min(512, _round_up(max(B, 1), 8))
    else:
        TB = batch_tile
    Bp = _round_up(B, TB)
    if Bp != B:
        x = jnp.pad(x, ((0, Bp - B), (0, 0)))
    xb = x.astype(jnp.bfloat16)                 # halve input DMA bytes; MXU runs bf16

    grid = (Bp // TB,)

    def tiled(width):
        # batch-tiled array; last dim kept at full extent (4 / 24 / 128 are legal as full extent)
        return pl.BlockSpec((TB, width), lambda i: (i, 0))

    def resident(arr):
        # full-array block with constant index map: DMA'd once, stays resident across steps
        return pl.BlockSpec(arr.shape, lambda i: (0, 0))

    args = (
        xb,
        params["w1"], params["b1"], params["w2"], params["b2"],
        params["wmid"], params["bmid"],
        params["wc2"], params["bc2"],
        params["wh"], params["bh"],
    )
    in_specs = [tiled(D)] + [resident(a) for a in args[1:]]
    out_specs = (tiled(CONT_DIM), tiled(DISC_DIM))

    cont, disc = pl.pallas_call(
        actor_critic_forward_kernel,
        grid=grid,
        in_specs=in_specs,
        out_specs=out_specs,
        out_shape=(
            jax.ShapeDtypeStruct((Bp, CONT_DIM), jnp.float32),
            jax.ShapeDtypeStruct((Bp, DISC_DIM), jnp.float32),
        ),
        compiler_params=pltpu.CompilerParams(
            dimension_semantics=("parallel",),          # shard batch steps across TCs (v7x)
            vmem_limit_bytes=32 * 1024 * 1024,          # explicit; actual use is ~2-3 MiB/step
        ),
    )(*args)

    return cont[:B], disc[:B]


def state_padding(state, tasks_dim, intervals_dim, input_target_size=INPUT_TARGET_SIZE):
    """JAX glue mirroring ActorCritic.state_padding for 2-D (batched) input."""
    pad = input_target_size - tasks_dim - intervals_dim
    assert pad >= 0, "The target size is too small to fit the input size"
    left = state[:, :tasks_dim]
    right = state[:, tasks_dim:tasks_dim + intervals_dim]
    pad_t = jnp.full((state.shape[0], pad), -1.0, dtype=state.dtype)
    return jnp.concatenate([left, pad_t, right], axis=1)


def init_params(key):
    """Deterministic PyTorch-Linear-style init (uniform in +-1/sqrt(fan_in)).

    Per-layer weights are generated exactly like the torch module, then the two
    256->128 head projections are fused into one (256,256) matrix and the two
    128->{8,16} output heads into one (128,24) matrix.  Weights are stored in
    bf16 (matmul inputs); biases stay f32 (added to the f32 MXU accumulator).
    """
    def linear(k, fan_in, fan_out):
        kw, kb = jax.random.split(k)
        bound = 1.0 / jnp.sqrt(jnp.float32(fan_in))
        w = jax.random.uniform(kw, (fan_in, fan_out), jnp.float32, -bound, bound)
        b = jax.random.uniform(kb, (1, fan_out), jnp.float32, -bound, bound)
        return w, b

    keys = jax.random.split(key, 7)
    w1, b1 = linear(keys[0], INPUT_TARGET_SIZE, H1)
    w2, b2 = linear(keys[1], H1, H2)
    wc1, bc1 = linear(keys[2], H2, H3)
    wc2, bc2 = linear(keys[3], H3, CONT_DIM)
    wd1, bd1 = linear(keys[4], H2, H3)
    wvm, bvm = linear(keys[5], H3, VM_DIM)
    wti, bti = linear(keys[6], H3, TASK_DIM)

    bf16 = jnp.bfloat16
    return {
        "w1": w1.astype(bf16), "b1": b1,
        "w2": w2.astype(bf16), "b2": b2,
        "wmid": jnp.concatenate([wc1, wd1], axis=1).astype(bf16),   # (256, 256)
        "bmid": jnp.concatenate([bc1, bd1], axis=1),                # (1, 256)
        "wc2": wc2.astype(bf16), "bc2": bc2,
        "wh": jnp.concatenate([wvm, wti], axis=1).astype(bf16),     # (128, 24)
        "bh": jnp.concatenate([bvm, bti], axis=1),                  # (1, 24)
    }


if __name__ == "__main__":
    key = jax.random.PRNGKey(0)
    pkey, skey = jax.random.split(key)
    params = init_params(pkey)

    B = 2
    tasks_dim, intervals_dim = 24, 40           # state_dim = {'tasks': 24, 'intervals': 40}
    raw_state = jax.random.normal(skey, (B, tasks_dim + intervals_dim), jnp.float32)

    x = state_padding(raw_state, tasks_dim, intervals_dim)   # (B, 128)
    cont_mean, disc_probs = actor_critic_forward(x, params)
    jax.block_until_ready((cont_mean, disc_probs))

    assert cont_mean.shape == (B, CONT_DIM)
    assert disc_probs.shape == (B, DISC_DIM)
    assert bool(jnp.all(jnp.isfinite(cont_mean))) and bool(jnp.all(jnp.isfinite(disc_probs)))
    # each softmax block sums to 1 (exact f32 softmax kept; bf16 only on matmul inputs)
    assert bool(jnp.allclose(jnp.sum(disc_probs[:, :VM_DIM], axis=-1), 1.0, atol=1e-5))
    assert bool(jnp.allclose(jnp.sum(disc_probs[:, VM_DIM:], axis=-1), 1.0, atol=1e-5))
    # continuous head is tanh-bounded
    assert bool(jnp.all(jnp.abs(cont_mean) <= 1.0))
    print("KERNEL_OK")
</pallas_src>

<mosaic_0001>
module attributes {stable_mosaic.version = 11 : i64} {
  func.func @actor_critic_forward_kernel(%arg0: i32, %arg1: memref<8x128xbf16, #tpu.memory_space<vmem>>, %arg2: memref<128x512xbf16, #tpu.memory_space<vmem>>, %arg3: memref<1x512xf32, #tpu.memory_space<vmem>>, %arg4: memref<512x256xbf16, #tpu.memory_space<vmem>>, %arg5: memref<1x256xf32, #tpu.memory_space<vmem>>, %arg6: memref<256x256xbf16, #tpu.memory_space<vmem>>, %arg7: memref<1x256xf32, #tpu.memory_space<vmem>>, %arg8: memref<128x4xbf16, #tpu.memory_space<vmem>>, %arg9: memref<1x4xf32, #tpu.memory_space<vmem>>, %arg10: memref<128x24xbf16, #tpu.memory_space<vmem>>, %arg11: memref<1x24xf32, #tpu.memory_space<vmem>>, %arg12: memref<8x4xf32, #tpu.memory_space<vmem>>, %arg13: memref<8x24xf32, #tpu.memory_space<vmem>>) attributes {dimension_semantics = [#tpu.dimension_semantics<parallel>], iteration_bounds = array<i64: 1>, scalar_prefetch = 0 : i64, scratch_operands = 0 : i64, tpu.core_type = #tpu.core_type<tc>, window_params = [{transform_indices = @transform_0, window_bounds = array<i64: 8, 128>}, {pipeline_mode = #tpu.pipeline_mode<synchronous>, transform_indices = @transform_1, window_bounds = array<i64: 128, 512>}, {pipeline_mode = #tpu.pipeline_mode<synchronous>, transform_indices = @transform_2, window_bounds = array<i64: 1, 512>}, {pipeline_mode = #tpu.pipeline_mode<synchronous>, transform_indices = @transform_3, window_bounds = array<i64: 512, 256>}, {pipeline_mode = #tpu.pipeline_mode<synchronous>, transform_indices = @transform_4, window_bounds = array<i64: 1, 256>}, {pipeline_mode = #tpu.pipeline_mode<synchronous>, transform_indices = @transform_5, window_bounds = array<i64: 256, 256>}, {pipeline_mode = #tpu.pipeline_mode<synchronous>, transform_indices = @transform_6, window_bounds = array<i64: 1, 256>}, {pipeline_mode = #tpu.pipeline_mode<synchronous>, transform_indices = @transform_7, window_bounds = array<i64: 128, 4>}, {pipeline_mode = #tpu.pipeline_mode<synchronous>, transform_indices = @transform_8, window_bounds = array<i64: 1, 4>}, {pipeline_mode = #tpu.pipeline_mode<synchronous>, transform_indices = @transform_9, window_bounds = array<i64: 128, 24>}, {pipeline_mode = #tpu.pipeline_mode<synchronous>, transform_indices = @transform_10, window_bounds = array<i64: 1, 24>}, {transform_indices = @transform_11, window_bounds = array<i64: 8, 4>}, {transform_indices = @transform_12, window_bounds = array<i64: 8, 24>}]} {
    %c0 = arith.constant 0 : index
    %c0_0 = arith.constant 0 : index
    %0 = vector.load %arg1[%c0, %c0_0] : memref<8x128xbf16, #tpu.memory_space<vmem>>, vector<8x128xbf16>
    %c0_1 = arith.constant 0 : index
    %c0_2 = arith.constant 0 : index
    %1 = vector.load %arg2[%c0_1, %c0_2] : memref<128x512xbf16, #tpu.memory_space<vmem>>, vector<128x512xbf16>
    %cst = arith.constant dense<0.000000e+00> : vector<8x512xf32>
    %2 = tpu.matmul %0, %1, %cst {dimension_numbers = #tpu.dot_dimension_numbers<[1], [0], [0], [1], [0, 0, 1, 1], [], []>} : vector<8x128xbf16>, vector<128x512xbf16>, vector<8x512xf32> -> vector<8x512xf32>
    %c0_3 = arith.constant 0 : index
    %c0_4 = arith.constant 0 : index
    %3 = vector.load %arg3[%c0_3, %c0_4] : memref<1x512xf32, #tpu.memory_space<vmem>>, vector<1x512xf32>
    %4 = vector.broadcast %3 : vector<1x512xf32> to vector<8x512xf32>
    %5 = arith.addf %2, %4 : vector<8x512xf32>
    %6 = math.tanh %5 : vector<8x512xf32>
    %7 = arith.truncf %6 : vector<8x512xf32> to vector<8x512xbf16>
    %c0_5 = arith.constant 0 : index
    %c0_6 = arith.constant 0 : index
    %8 = vector.load %arg4[%c0_5, %c0_6] : memref<512x256xbf16, #tpu.memory_space<vmem>>, vector<512x256xbf16>
    %cst_7 = arith.constant dense<0.000000e+00> : vector<8x256xf32>
    %9 = tpu.matmul %7, %8, %cst_7 {dimension_numbers = #tpu.dot_dimension_numbers<[1], [0], [0], [1], [0, 0, 1, 1], [], []>} : vector<8x512xbf16>, vector<512x256xbf16>, vector<8x256xf32> -> vector<8x256xf32>
    %c0_8 = arith.constant 0 : index
    %c0_9 = arith.constant 0 : index
    %10 = vector.load %arg5[%c0_8, %c0_9] : memref<1x256xf32, #tpu.memory_space<vmem>>, vector<1x256xf32>
    %11 = vector.broadcast %10 : vector<1x256xf32> to vector<8x256xf32>
    %12 = arith.addf %9, %11 : vector<8x256xf32>
    %13 = math.tanh %12 : vector<8x256xf32>
    %14 = arith.truncf %13 : vector<8x256xf32> to vector<8x256xbf16>
    %c0_10 = arith.constant 0 : index
    %c0_11 = arith.constant 0 : index
    %15 = vector.load %arg6[%c0_10, %c0_11] : memref<256x256xbf16, #tpu.memory_space<vmem>>, vector<256x256xbf16>
    %cst_12 = arith.constant dense<0.000000e+00> : vector<8x256xf32>
    %16 = tpu.matmul %14, %15, %cst_12 {dimension_numbers = #tpu.dot_dimension_numbers<[1], [0], [0], [1], [0, 0, 1, 1], [], []>} : vector<8x256xbf16>, vector<256x256xbf16>, vector<8x256xf32> -> vector<8x256xf32>
    %c0_13 = arith.constant 0 : index
    %c0_14 = arith.constant 0 : index
    %17 = vector.load %arg7[%c0_13, %c0_14] : memref<1x256xf32, #tpu.memory_space<vmem>>, vector<1x256xf32>
    %18 = vector.broadcast %17 : vector<1x256xf32> to vector<8x256xf32>
    %19 = arith.addf %16, %18 : vector<8x256xf32>
    %20 = math.tanh %19 : vector<8x256xf32>
    %21 = vector.extract_strided_slice %20 {offsets = [0, 0], sizes = [8, 128], strides = [1, 1]} : vector<8x256xf32> to vector<8x128xf32>
    %22 = vector.extract_strided_slice %20 {offsets = [0, 128], sizes = [8, 128], strides = [1, 1]} : vector<8x256xf32> to vector<8x128xf32>
    %23 = arith.truncf %21 : vector<8x128xf32> to vector<8x128xbf16>
    %c0_15 = arith.constant 0 : index
    %c0_16 = arith.constant 0 : index
    %24 = vector.load %arg8[%c0_15, %c0_16] : memref<128x4xbf16, #tpu.memory_space<vmem>>, vector<128x4xbf16>
    %cst_17 = arith.constant dense<0.000000e+00> : vector<8x4xf32>
    %25 = tpu.matmul %23, %24, %cst_17 {dimension_numbers = #tpu.dot_dimension_numbers<[1], [0], [0], [1], [0, 0, 1, 1], [], []>} : vector<8x128xbf16>, vector<128x4xbf16>, vector<8x4xf32> -> vector<8x4xf32>
    %c0_18 = arith.constant 0 : index
    %c0_19 = arith.constant 0 : index
    %26 = vector.load %arg9[%c0_18, %c0_19] : memref<1x4xf32, #tpu.memory_space<vmem>>, vector<1x4xf32>
    %27 = vector.broadcast %26 : vector<1x4xf32> to vector<8x4xf32>
    %28 = arith.addf %25, %27 : vector<8x4xf32>
    %29 = math.tanh %28 : vector<8x4xf32>
    %c0_20 = arith.constant 0 : index
    %c0_21 = arith.constant 0 : index
    %30 = vector.load %arg12[%c0_20, %c0_21] : memref<8x4xf32, #tpu.memory_space<vmem>>, vector<8x4xf32>
    tpu.vector_store %arg12[%c0_20, %c0_21], %29 {strides = array<i32>} : memref<8x4xf32, #tpu.memory_space<vmem>>, vector<8x4xf32>,
    %31 = arith.truncf %22 : vector<8x128xf32> to vector<8x128xbf16>
    %c0_22 = arith.constant 0 : index
    %c0_23 = arith.constant 0 : index
    %32 = vector.load %arg10[%c0_22, %c0_23] : memref<128x24xbf16, #tpu.memory_space<vmem>>, vector<128x24xbf16>
    %cst_24 = arith.constant dense<0.000000e+00> : vector<8x24xf32>
    %33 = tpu.matmul %31, %32, %cst_24 {dimension_numbers = #tpu.dot_dimension_numbers<[1], [0], [0], [1], [0, 0, 1, 1], [], []>} : vector<8x128xbf16>, vector<128x24xbf16>, vector<8x24xf32> -> vector<8x24xf32>
    %c0_25 = arith.constant 0 : index
    %c0_26 = arith.constant 0 : index
    %34 = vector.load %arg11[%c0_25, %c0_26] : memref<1x24xf32, #tpu.memory_space<vmem>>, vector<1x24xf32>
    %35 = vector.broadcast %34 : vector<1x24xf32> to vector<8x24xf32>
    %36 = arith.addf %33, %35 : vector<8x24xf32>
    %37 = vector.extract_strided_slice %36 {offsets = [0, 0], sizes = [8, 8], strides = [1, 1]} : vector<8x24xf32> to vector<8x8xf32>
    %cst_27 = arith.constant dense<0xFF800000> : vector<8xf32>
    %38 = vector.multi_reduction <maximumf>, %37, %cst_27 [1] : vector<8x8xf32> to vector<8xf32>
    %39 = vector.shape_cast %38 : vector<8xf32> to vector<8x1xf32>
    %40 = vector.broadcast %39 : vector<8x1xf32> to vector<8x8xf32>
    %41 = arith.subf %37, %40 : vector<8x8xf32>
    %42 = math.exp %41 : vector<8x8xf32>
    %cst_28 = arith.constant dense<0.000000e+00> : vector<8xf32>
    %43 = vector.multi_reduction <add>, %42, %cst_28 [1] : vector<8x8xf32> to vector<8xf32>
    %44 = vector.shape_cast %43 : vector<8xf32> to vector<8x1xf32>
    %45 = vector.broadcast %44 : vector<8x1xf32> to vector<8x8xf32>
    %46 = arith.divf %42, %45 : vector<8x8xf32>
    %47 = vector.extract_strided_slice %36 {offsets = [0, 8], sizes = [8, 16], strides = [1, 1]} : vector<8x24xf32> to vector<8x16xf32>
    %cst_29 = arith.constant dense<0xFF800000> : vector<8xf32>
    %48 = vector.multi_reduction <maximumf>, %47, %cst_29 [1] : vector<8x16xf32> to vector<8xf32>
    %49 = vector.shape_cast %48 : vector<8xf32> to vector<8x1xf32>
    %50 = vector.broadcast %49 : vector<8x1xf32> to vector<8x16xf32>
    %51 = arith.subf %47, %50 : vector<8x16xf32>
    %52 = math.exp %51 : vector<8x16xf32>
    %cst_30 = arith.constant dense<0.000000e+00> : vector<8xf32>
    %53 = vector.multi_reduction <add>, %52, %cst_30 [1] : vector<8x16xf32> to vector<8xf32>
    %54 = vector.shape_cast %53 : vector<8xf32> to vector<8x1xf32>
    %55 = vector.broadcast %54 : vector<8x1xf32> to vector<8x16xf32>
    %56 = arith.divf %52, %55 : vector<8x16xf32>
    %57 = tpu.concatenate %46, %56 in 1 : vector<8x8xf32>, vector<8x16xf32> -> vector<8x24xf32>
    %c0_31 = arith.constant 0 : index
    %c0_32 = arith.constant 0 : index
    %58 = vector.load %arg13[%c0_31, %c0_32] : memref<8x24xf32, #tpu.memory_space<vmem>>, vector<8x24xf32>
    tpu.vector_store %arg13[%c0_31, %c0_32], %57 {strides = array<i32>} : memref<8x24xf32, #tpu.memory_space<vmem>>, vector<8x24xf32>,
    return
  }
  func.func @transform_0(%arg0: i32) -> (i32, i32) {
    %c0_i32 = arith.constant 0 : i32
    %c0_i32_0 = arith.constant 0 : i32
    return %arg0, %c0_i32 : i32, i32
  }
  func.func @transform_1(%arg0: i32) -> (i32, i32) {
    %c0_i32 = arith.constant 0 : i32
    %c0_i32_0 = arith.constant 0 : i32
    %c0_i32_1 = arith.constant 0 : i32
    return %c0_i32, %c0_i32_0 : i32, i32
  }
  func.func @transform_2(%arg0: i32) -> (i32, i32) {
    %c0_i32 = arith.constant 0 : i32
    %c0_i32_0 = arith.constant 0 : i32
    %c0_i32_1 = arith.constant 0 : i32
    return %c0_i32, %c0_i32_0 : i32, i32
  }
  func.func @transform_3(%arg0: i32) -> (i32, i32) {
    %c0_i32 = arith.constant 0 : i32
    %c0_i32_0 = arith.constant 0 : i32
    %c0_i32_1 = arith.constant 0 : i32
    return %c0_i32, %c0_i32_0 : i32, i32
  }
  func.func @transform_4(%arg0: i32) -> (i32, i32) {
    %c0_i32 = arith.constant 0 : i32
    %c0_i32_0 = arith.constant 0 : i32
    %c0_i32_1 = arith.constant 0 : i32
    return %c0_i32, %c0_i32_0 : i32, i32
  }
  func.func @transform_5(%arg0: i32) -> (i32, i32) {
    %c0_i32 = arith.constant 0 : i32
    %c0_i32_0 = arith.constant 0 : i32
    %c0_i32_1 = arith.constant 0 : i32
    return %c0_i32, %c0_i32_0 : i32, i32
  }
  func.func @transform_6(%arg0: i32) -> (i32, i32) {
    %c0_i32 = arith.constant 0 : i32
    %c0_i32_0 = arith.constant 0 : i32
    %c0_i32_1 = arith.constant 0 : i32
    return %c0_i32, %c0_i32_0 : i32, i32
  }
  func.func @transform_7(%arg0: i32) -> (i32, i32) {
    %c0_i32 = arith.constant 0 : i32
    %c0_i32_0 = arith.constant 0 : i32
    %c0_i32_1 = arith.constant 0 : i32
    return %c0_i32, %c0_i32_0 : i32, i32
  }
  func.func @transform_8(%arg0: i32) -> (i32, i32) {
    %c0_i32 = arith.constant 0 : i32
    %c0_i32_0 = arith.constant 0 : i32
    %c0_i32_1 = arith.constant 0 : i32
    return %c0_i32, %c0_i32_0 : i32, i32
  }
  func.func @transform_9(%arg0: i32) -> (i32, i32) {
    %c0_i32 = arith.constant 0 : i32
    %c0_i32_0 = arith.constant 0 : i32
    %c0_i32_1 = arith.constant 0 : i32
    return %c0_i32, %c0_i32_0 : i32, i32
  }
  func.func @transform_10(%arg0: i32) -> (i32, i32) {
    %c0_i32 = arith.constant 0 : i32
    %c0_i32_0 = arith.constant 0 : i32
    %c0_i32_1 = arith.constant 0 : i32
    return %c0_i32, %c0_i32_0 : i32, i32
  }
  func.func @transform_11(%arg0: i32) -> (i32, i32) {
    %c0_i32 = arith.constant 0 : i32
    %c0_i32_0 = arith.constant 0 : i32
    return %arg0, %c0_i32 : i32, i32
  }
  func.func @transform_12(%arg0: i32) -> (i32, i32) {
    %c0_i32 = arith.constant 0 : i32
    %c0_i32_0 = arith.constant 0 : i32
    return %arg0, %c0_i32 : i32, i32
  }
}

</mosaic_0001>

<llo_original>
// kernel: tpu_custom_call.1
$region0: #{tpu_custom_call.1}
  #allocation0 [shape = 'u32[]', space=smem, size = 0x4, offset = 0x4, fixed_abs, tag = 'smem constant byte address 0x4 - core index']
  #allocation1 [shape = 'u32[144,128]{1,0:T(1,128)}', space=vmem, size = 0x12000, scoped, tag = 'internal scratch']
  %s0 = inlined_call_operand.vmem [shape: bf16[8,128], index: 0, kind: input, shape index: {}]
  %s1 = inlined_call_operand.hbm [shape: bf16[128,512], index: 1, kind: input, shape index: {}]
  %s2 = inlined_call_operand.vmem [shape: f32[1,512], index: 2, kind: input, shape index: {}]
  %s3 = inlined_call_operand.hbm [shape: bf16[512,256], index: 3, kind: input, shape index: {}]
  %s4 = inlined_call_operand.vmem [shape: f32[1,256], index: 4, kind: input, shape index: {}]
  %s5 = inlined_call_operand.hbm [shape: bf16[256,256], index: 5, kind: input, shape index: {}]
  %s6 = inlined_call_operand.vmem [shape: f32[1,256], index: 6, kind: input, shape index: {}]
  %s7 = inlined_call_operand.vmem [shape: bf16[128,4], index: 7, kind: input, shape index: {}]
  %s8 = inlined_call_operand.vmem [shape: f32[1,4], index: 8, kind: input, shape index: {}]
  %s9 = inlined_call_operand.vmem [shape: bf16[128,24], index: 9, kind: input, shape index: {}]
  %s10 = inlined_call_operand.vmem [shape: f32[1,24], index: 10, kind: input, shape index: {}]
  %s11 = inlined_call_operand.vmem [shape: f32[8,4], index: 11, kind: output, shape index: {0}]
  %s12 = inlined_call_operand.hbm [shape: f32[8,24], index: 12, kind: output, shape index: {1}]
  %13 = xla_tuple %s11, %s12
  %s14 = sld [smem:[#allocation0]]
  $region74: #{tpu_custom_call.1} parent=0
    _
  %s16 = ssub.s32 1, %s14
  %s17 = scalar_select 0, %s16, %s14
  $region1: #{tpu_custom_call.1} parent=0
    #allocation2 [shape = 'u8[131072]{0}', space=vmem, size = 0x20000, scoped, tag = 'input window, operand 1, single buffered']
    #allocation3 [shape = 's32[1]{0}', space=sflag, size = 0x4, scoped, tag = 'scoped memory for tpu_custom_call.1']
    #allocation4 [shape = 's32[1]{0}', space=sflag, size = 0x4, scoped, tag = 'scoped memory for tpu_custom_call.1']
    #allocation5 [shape = 'u8[262144]{0}', space=vmem, size = 0x40000, scoped, tag = 'input window, operand 3, single buffered']
    #allocation6 [shape = 's32[1]{0}', space=sflag, size = 0x4, scoped, tag = 'scoped memory for tpu_custom_call.1']
    #allocation7 [shape = 'u8[131072]{0}', space=vmem, size = 0x20000, scoped, tag = 'input window, operand 5, single buffered']
    #allocation8 [shape = 'u8[4096]{0}', space=vmem, size = 0x1000, scoped, tag = 'output window, operand 1, single buffered']
    %18 = vsyncpa [#allocation3], 0
    %19 = vsyncpa [#allocation6], 0
    %20 = vsyncpa [#allocation4], 0
    // Predicated region
    $region2: #{tpu_custom_call.1} parent=1 // pred_check
      _
    $region3: #{tpu_custom_call.1} parent=1 // pred_check_branch
      %22 = sbr.rel (0) target = $region5
    $region4: #{tpu_custom_call.1} parent=1 // pred_region
      _
    $region5: #{tpu_custom_call.1} parent=1 // pred_fallthru
      _
    // Predicated region
    $region6: #{tpu_custom_call.1} parent=1 // pred_check
      _
    $region7: #{tpu_custom_call.1} parent=1 // pred_check_branch
      %24 = sbr.rel (0) target = $region9
    $region8: #{tpu_custom_call.1} parent=1 // pred_region
      %s26 = ssub.s32 4096, 4096
      %27 = vsyncadd [#allocation3], %s26
      %s28 = sshll.u32 [#allocation2], 4
      %s29 = int_to_ptr.vmem [resolvable:$true] %s28
      %34 = dma.hbm_to_vmem [thread:$0]  %s1, 4096, %s29, [#allocation3], 256, 256, 16
    $region9: #{tpu_custom_call.1} parent=1 // pred_fallthru
      _
    // Predicated region
    $region10: #{tpu_custom_call.1} parent=1 // pred_check
      _
    $region11: #{tpu_custom_call.1} parent=1 // pred_check_branch
      %36 = sbr.rel (0) target = $region13
    $region12: #{tpu_custom_call.1} parent=1 // pred_region
      _
    $region13: #{tpu_custom_call.1} parent=1 // pred_fallthru
      _
    // Predicated region
    $region14: #{tpu_custom_call.1} parent=1 // pred_check
      _
    $region15: #{tpu_custom_call.1} parent=1 // pred_check_branch
      %38 = sbr.rel (0) target = $region17
    $region16: #{tpu_custom_call.1} parent=1 // pred_region
      %s40 = ssub.s32 8192, 8192
      %41 = vsyncadd [#allocation6], %s40
      %s42 = sshll.u32 [#allocation5], 4
      %s43 = int_to_ptr.vmem [resolvable:$true] %s42
      %48 = dma.hbm_to_vmem [thread:$0]  %s3, 8192, %s43, [#allocation6], 128, 128, 8
    $region17: #{tpu_custom_call.1} parent=1 // pred_fallthru
      _
    // Predicated region
    $region18: #{tpu_custom_call.1} parent=1 // pred_check
      _
    $region19: #{tpu_custom_call.1} parent=1 // pred_check_branch
      %50 = sbr.rel (0) target = $region21
    $region20: #{tpu_custom_call.1} parent=1 // pred_region
      _
    $region21: #{tpu_custom_call.1} parent=1 // pred_fallthru
      _
    // Predicated region
    $region22: #{tpu_custom_call.1} parent=1 // pred_check
      _
    $region23: #{tpu_custom_call.1} parent=1 // pred_check_branch
      %52 = sbr.rel (0) target = $region25
    $region24: #{tpu_custom_call.1} parent=1 // pred_region
      %s54 = ssub.s32 4096, 4096
      %55 = vsyncadd [#allocation6], %s54
      %s56 = sshll.u32 [#allocation7], 4
      %s57 = int_to_ptr.vmem [resolvable:$true] %s56
      %62 = dma.hbm_to_vmem [thread:$0]  %s5, 4096, %s57, [#allocation6], 128, 128, 8
    $region25: #{tpu_custom_call.1} parent=1 // pred_fallthru
      _
    // Predicated region
    $region26: #{tpu_custom_call.1} parent=1 // pred_check
      _
    $region27: #{tpu_custom_call.1} parent=1 // pred_check_branch
      %64 = sbr.rel (0) target = $region29
    $region28: #{tpu_custom_call.1} parent=1 // pred_region
      _
    $region29: #{tpu_custom_call.1} parent=1 // pred_fallthru
      _
    // Predicated region
    $region30: #{tpu_custom_call.1} parent=1 // pred_check
      _
    $region31: #{tpu_custom_call.1} parent=1 // pred_check_branch
      %66 = sbr.rel (0) target = $region33
    $region32: #{tpu_custom_call.1} parent=1 // pred_region
      _
    $region33: #{tpu_custom_call.1} parent=1 // pred_fallthru
      _
    // Predicated region
    $region34: #{tpu_custom_call.1} parent=1 // pred_check
      _
    $region35: #{tpu_custom_call.1} parent=1 // pred_check_branch
      %68 = sbr.rel (0) target = $region37
    $region36: #{tpu_custom_call.1} parent=1 // pred_region
      _
    $region37: #{tpu_custom_call.1} parent=1 // pred_fallthru
      _
    // Predicated region
    $region38: #{tpu_custom_call.1} parent=1 // pred_check
      _
    $region39: #{tpu_custom_call.1} parent=1 // pred_check_branch
      %70 = sbr.rel (0) target = $region41
    $region40: #{tpu_custom_call.1} parent=1 // pred_region
      _
    $region41: #{tpu_custom_call.1} parent=1 // pred_fallthru
      _
    // Predicated region
    $region42: #{tpu_custom_call.1} parent=1 // pred_check
      _
    $region43: #{tpu_custom_call.1} parent=1 // pred_check_branch
      %72 = sbr.rel (0) target = $region45
    $region44: #{tpu_custom_call.1} parent=1 // pred_region
      _
    $region45: #{tpu_custom_call.1} parent=1 // pred_fallthru
      _
    // Predicated region
    $region46: #{tpu_custom_call.1} parent=1 // pred_check
      _
    $region47: #{tpu_custom_call.1} parent=1 // pred_check_branch
      %74 = sbr.rel (0) target = $region49
    $region48: #{tpu_custom_call.1} parent=1 // pred_region
      %75 = dma.done [#allocation3], 4096
    $region49: #{tpu_custom_call.1} parent=1 // pred_fallthru
      _
    // Predicated region
    $region50: #{tpu_custom_call.1} parent=1 // pred_check
      _
    $region51: #{tpu_custom_call.1} parent=1 // pred_check_branch
      %77 = sbr.rel (0) target = $region53
    $region52: #{tpu_custom_call.1} parent=1 // pred_region
      %78 = dma.done [#allocation6], 8192
    $region53: #{tpu_custom_call.1} parent=1 // pred_fallthru
      _
    // Predicated region
    $region54: #{tpu_custom_call.1} parent=1 // pred_check
      _
    $region55: #{tpu_custom_call.1} parent=1 // pred_check_branch
      %80 = sbr.rel (0) target = $region57
    $region56: #{tpu_custom_call.1} parent=1 // pred_region
      %81 = dma.done [#allocation6], 4096
    $region57: #{tpu_custom_call.1} parent=1 // pred_fallthru
      _
    %v83 = vld [vmem:[%s0] sm:$0xf]
    %v84 = vld [vmem:[#allocation2] sm:$0xff]
    %v85 = vld [vmem:[#allocation2 + $0x8] sm:$0xff]
    %v86 = vld [vmem:[#allocation2 + $0x10] sm:$0xff]
    %v87 = vld [vmem:[#allocation2 + $0x18] sm:$0xff]
    %v88 = vld [vmem:[#allocation2 + $0x20] sm:$0xff]
    %v89 = vld [vmem:[#allocation2 + $0x28] sm:$0xff]
    %v90 = vld [vmem:[#allocation2 + $0x30] sm:$0xff]
    %v91 = vld [vmem:[#allocation2 + $0x38] sm:$0xff]
    %v92 = vld [vmem:[#allocation2 + $0x40] sm:$0xff]
    %v93 = vld [vmem:[#allocation2 + $0x48] sm:$0xff]
    %v94 = vld [vmem:[#allocation2 + $0x50] sm:$0xff]
    %v95 = vld [vmem:[#allocation2 + $0x58] sm:$0xff]
    %v96 = vld [vmem:[#allocation2 + $0x60] sm:$0xff]
    %v97 = vld [vmem:[#allocation2 + $0x68] sm:$0xff]
    %v98 = vld [vmem:[#allocation2 + $0x70] sm:$0xff]
    %v99 = vld [vmem:[#allocation2 + $0x78] sm:$0xff]
    %v100 = vld [vmem:[#allocation2 + $0x80] sm:$0xff]
    %v101 = vld [vmem:[#allocation2 + $0x88] sm:$0xff]
    %v102 = vld [vmem:[#allocation2 + $0x90] sm:$0xff]
    %v103 = vld [vmem:[#allocation2 + $0x98] sm:$0xff]
    %v104 = vld [vmem:[#allocation2 + $0xa0] sm:$0xff]
    %v105 = vld [vmem:[#allocation2 + $0xa8] sm:$0xff]
    %v106 = vld [vmem:[#allocation2 + $0xb0] sm:$0xff]
    %v107 = vld [vmem:[#allocation2 + $0xb8] sm:$0xff]
    %v108 = vld [vmem:[#allocation2 + $0xc0] sm:$0xff]
    %v109 = vld [vmem:[#allocation2 + $0xc8] sm:$0xff]
    %v110 = vld [vmem:[#allocation2 + $0xd0] sm:$0xff]
    %v111 = vld [vmem:[#allocation2 + $0xd8] sm:$0xff]
    %v112 = vld [vmem:[#allocation2 + $0xe0] sm:$0xff]
    %v113 = vld [vmem:[#allocation2 + $0xe8] sm:$0xff]
    %v114 = vld [vmem:[#allocation2 + $0xf0] sm:$0xff]
    %v115 = vld [vmem:[#allocation2 + $0xf8] sm:$0xff]
    %v116 = vld [vmem:[%s2] sm:$0xf]
    %v118 = vlaneseq
    %v119 = vshrl.u32 %v118, 7
    %v120 = vsub.s32 0, %v119
    %v121 = vrot.slane %v116, %v120
    %v122 = vlaneseq
    %v123 = vshrl.u32 %v122, 7
    %v124 = vsub.s32 1, %v123
    %v125 = vrot.slane %v116, %v124
    %v126 = vlaneseq
    %v127 = vshrl.u32 %v126, 7
    %v128 = vsub.s32 2, %v127
    %v129 = vrot.slane %v116, %v128
    %v130 = vlaneseq
    %v131 = vshrl.u32 %v130, 7
    %v132 = vsub.s32 3, %v131
    %v133 = vrot.slane %v116, %v132
    %v170 = vunpack.c.l.b16 %v84
    %v171 = vunpack.c.h.b16 %v84
    %v172 = vunpack.c.l.b16 %v85
    %v173 = vunpack.c.h.b16 %v85
    %v174 = vunpack.c.l.b16 %v86
    %v175 = vunpack.c.h.b16 %v86
    %v176 = vunpack.c.l.b16 %v87
    %v177 = vunpack.c.h.b16 %v87
    %v178 = vunpack.c.l.b16 %v88
    %v179 = vunpack.c.h.b16 %v88
    %v180 = vunpack.c.l.b16 %v89
    %v181 = vunpack.c.h.b16 %v89
    %v182 = vunpack.c.l.b16 %v90
    %v183 = vunpack.c.h.b16 %v90
    %v184 = vunpack.c.l.b16 %v91
    %v185 = vunpack.c.h.b16 %v91
    %v186 = vunpack.c.l.b16 %v92
    %v187 = vunpack.c.h.b16 %v92
    %v188 = vunpack.c.l.b16 %v93
    %v189 = vunpack.c.h.b16 %v93
    %v190 = vunpack.c.l.b16 %v94
    %v191 = vunpack.c.h.b16 %v94
    %v192 = vunpack.c.l.b16 %v95
    %v193 = vunpack.c.h.b16 %v95
    %v194 = vunpack.c.l.b16 %v96
    %v195 = vunpack.c.h.b16 %v96
    %v196 = vunpack.c.l.b16 %v97
    %v197 = vunpack.c.h.b16 %v97
    %v198 = vunpack.c.l.b16 %v98
    %v199 = vunpack.c.h.b16 %v98
    %v200 = vunpack.c.l.b16 %v99
    %v201 = vunpack.c.h.b16 %v99
    %v202 = vunpack.c.l.b16 %v100
    %v203 = vunpack.c.h.b16 %v100
    %v204 = vunpack.c.l.b16 %v101
    %v205 = vunpack.c.h.b16 %v101
    %v206 = vunpack.c.l.b16 %v102
    %v207 = vunpack.c.h.b16 %v102
    %v208 = vunpack.c.l.b16 %v103
    %v209 = vunpack.c.h.b16 %v103
    %v210 = vunpack.c.l.b16 %v104
    %v211 = vunpack.c.h.b16 %v104
    %v212 = vunpack.c.l.b16 %v105
    %v213 = vunpack.c.h.b16 %v105
    %v214 = vunpack.c.l.b16 %v106
    %v215 = vunpack.c.h.b16 %v106
    %v216 = vunpack.c.l.b16 %v107
    %v217 = vunpack.c.h.b16 %v107
    %v218 = vunpack.c.l.b16 %v108
    %v219 = vunpack.c.h.b16 %v108
    %v220 = vunpack.c.l.b16 %v109
    %v221 = vunpack.c.h.b16 %v109
    %v222 = vunpack.c.l.b16 %v110
    %v223 = vunpack.c.h.b16 %v110
    %v224 = vunpack.c.l.b16 %v111
    %v225 = vunpack.c.h.b16 %v111
    %v226 = vunpack.c.l.b16 %v112
    %v227 = vunpack.c.h.b16 %v112
    %v228 = vunpack.c.l.b16 %v113
    %v229 = vunpack.c.h.b16 %v113
    %v230 = vunpack.c.l.b16 %v114
    %v231 = vunpack.c.h.b16 %v114
    %v232 = vunpack.c.l.b16 %v115
    %v233 = vunpack.c.h.b16 %v115
    %v234 = vpack.c.b16 %v174, %v170
    %v235 = vpack.c.b16 %v175, %v171
    %v236 = vpack.c.b16 %v176, %v172
    %v237 = vpack.c.b16 %v177, %v173
    %v238 = vpack.c.b16 %v182, %v178
    %v239 = vpack.c.b16 %v183, %v179
    %v240 = vpack.c.b16 %v184, %v180
    %v241 = vpack.c.b16 %v185, %v181
    %v242 = vpack.c.b16 %v190, %v186
    %v243 = vpack.c.b16 %v191, %v187
    %v244 = vpack.c.b16 %v192, %v188
    %v245 = vpack.c.b16 %v193, %v189
    %v246 = vpack.c.b16 %v198, %v194
    %v247 = vpack.c.b16 %v199, %v195
    %v248 = vpack.c.b16 %v200, %v196
    %v249 = vpack.c.b16 %v201, %v197
    %v250 = vpack.c.b16 %v206, %v202
    %v251 = vpack.c.b16 %v207, %v203
    %v252 = vpack.c.b16 %v208, %v204
    %v253 = vpack.c.b16 %v209, %v205
    %v254 = vpack.c.b16 %v214, %v210
    %v255 = vpack.c.b16 %v215, %v211
    %v256 = vpack.c.b16 %v216, %v212
    %v257 = vpack.c.b16 %v217, %v213
    %v258 = vpack.c.b16 %v222, %v218
    %v259 = vpack.c.b16 %v223, %v219
    %v260 = vpack.c.b16 %v224, %v220
    %v261 = vpack.c.b16 %v225, %v221
    %v262 = vpack.c.b16 %v230, %v226
    %v263 = vpack.c.b16 %v231, %v227
    %v264 = vpack.c.b16 %v232, %v228
    %v265 = vpack.c.b16 %v233, %v229
    %298 = vmatprep.subr.bf16.mxu0 %v235
    %299 = vmatpush1.bf16.msra.mxu0 %v234
    %300 = vmatprep.subr.bf16.mxu0 %v239
    %301 = vmatpush1.bf16.msra.mxu0 %v238
    %302 = vmatprep.subr.bf16.mxu0 %v243
    %303 = vmatpush1.bf16.msra.mxu0 %v242
    %304 = vmatprep.subr.bf16.mxu0 %v247
    %305 = vmatpush1.bf16.msra.mxu0 %v246
    %306 = vmatprep.subr.bf16.mxu0 %v251
    %307 = vmatpush1.bf16.msra.mxu0 %v250
    %308 = vmatprep.subr.bf16.mxu0 %v255
    %309 = vmatpush1.bf16.msra.mxu0 %v254
    %310 = vmatprep.subr.bf16.mxu0 %v259
    %311 = vmatpush1.bf16.msra.mxu0 %v258
    %312 = vmatprep.subr.bf16.mxu0 %v263
    %313 = vmatpush1.bf16.msra.mxu0 %v262
    %314 = vmatprep.subr.bf16.mxu0 0
    %315 = vmatpush1.bf16.msra.mxu0 0
    %316 = vmatprep.subr.bf16.mxu0 0
    %317 = vmatpush1.bf16.msra.mxu0 0
    %318 = vmatprep.subr.bf16.mxu0 0
    %319 = vmatpush1.bf16.msra.mxu0 0
    %320 = vmatprep.subr.bf16.mxu0 0
    %321 = vmatpush1.bf16.msra.mxu0 0
    %322 = vmatprep.subr.bf16.mxu0 0
    %323 = vmatpush1.bf16.msra.mxu0 0
    %324 = vmatprep.subr.bf16.mxu0 0
    %325 = vmatpush1.bf16.msra.mxu0 0
    %326 = vmatprep.subr.bf16.mxu0 0
    %327 = vmatpush1.bf16.msra.mxu0 0
    %328 = vmatprep.subr.bf16.mxu0 0
    %329 = vmatpush1.bf16.msra.mxu0 0
    %330 = vmatprep.mubr.bf16.mxu0 0
    %331 = vmatmul.mubr.bf16.gmra.mrb[0].mxu0 %v83
    %v332 = vpop.f32.mrb[0].mxu0
    %v333 = vadd.f32 %v121, %v332
    %v334 = vpop.f32.mrb[0].mxu0
    %v335 = vadd.f32 %v125, %v334
    %v336 = vpop.f32.mrb[0].mxu0
    %v337 = vpop.f32.mrb[0].mxu0
    %338 = vdwg.mxu0
    %339 = vmatprep.subr.bf16.mxu0 %v237
    %340 = vmatpush1.bf16.msra.mxu0 %v236
    %341 = vmatprep.subr.bf16.mxu0 %v241
    %342 = vmatpush1.bf16.msra.mxu0 %v240
    %343 = vmatprep.subr.bf16.mxu0 %v245
    %344 = vmatpush1.bf16.msra.mxu0 %v244
    %345 = vmatprep.subr.bf16.mxu0 %v249
    %346 = vmatpush1.bf16.msra.mxu0 %v248
    %347 = vmatprep.subr.bf16.mxu0 %v253
    %348 = vmatpush1.bf16.msra.mxu0 %v252
    %349 = vmatprep.subr.bf16.mxu0 %v257
    %350 = vmatpush1.bf16.msra.mxu0 %v256
    %351 = vmatprep.subr.bf16.mxu0 %v261
    %352 = vmatpush1.bf16.msra.mxu0 %v260
    %353 = vmatprep.subr.bf16.mxu0 %v265
    %354 = vmatpush1.bf16.msra.mxu0 %v264
    %355 = vmatprep.subr.bf16.mxu0 0
    %356 = vmatpush1.bf16.msra.mxu0 0
    %357 = vmatprep.subr.bf16.mxu0 0
    %358 = vmatpush1.bf16.msra.mxu0 0
    %359 = vmatprep.subr.bf16.mxu0 0
    %360 = vmatpush1.bf16.msra.mxu0 0
    %361 = vmatprep.subr.bf16.mxu0 0
    %362 = vmatpush1.bf16.msra.mxu0 0
    %363 = vmatprep.subr.bf16.mxu0 0
    %364 = vmatpush1.bf16.msra.mxu0 0
    %365 = vmatprep.subr.bf16.mxu0 0
    %366 = vmatpush1.bf16.msra.mxu0 0
    %367 = vmatprep.subr.bf16.mxu0 0
    %368 = vmatpush1.bf16.msra.mxu0 0
    %369 = vmatprep.subr.bf16.mxu0 0
    %370 = vmatpush1.bf16.msra.mxu0 0
    %371 = vmatprep.mubr.bf16.mxu0 0
    %372 = vmatmul.mubr.bf16.gmra.mrb[0].mxu0 %v83
    %v373 = vpop.f32.mrb[0].mxu0
    %v374 = vadd.f32 %v129, %v373
    %v375 = vpop.f32.mrb[0].mxu0
    %v376 = vadd.f32 %v133, %v375
    %v377 = vpop.f32.mrb[0].mxu0
    %v378 = vpop.f32.mrb[0].mxu0
    %379 = vdwg.mxu0
    %v380 = vtanh.pop %v333
    %v381 = vtanh.pop %v335
    %v382 = vtanh.pop %v374
    %v383 = vtanh.pop %v376
    %v384 = vpack.c.bf16 %v380, %v380
    %v385 = vpack.c.bf16 %v381, %v381
    %v386 = vpack.c.bf16 %v382, %v382
    %v387 = vpack.c.bf16 %v383, %v383
    %v388 = vld [vmem:[#allocation5] sm:$0xff]
    %v389 = vld [vmem:[#allocation5 + $0x8] sm:$0xff]
    %v390 = vld [vmem:[#allocation5 + $0x10] sm:$0xff]
    %v391 = vld [vmem:[#allocation5 + $0x18] sm:$0xff]
    %v392 = vld [vmem:[#allocation5 + $0x20] sm:$0xff]
    %v393 = vld [vmem:[#allocation5 + $0x28] sm:$0xff]
    %v394 = vld [vmem:[#allocation5 + $0x30] sm:$0xff]
    %v395 = vld [vmem:[#allocation5 + $0x38] sm:$0xff]
    %v396 = vld [vmem:[#allocation5 + $0x40] sm:$0xff]
    %v397 = vld [vmem:[#allocation5 + $0x48] sm:$0xff]
    %v398 = vld [vmem:[#allocation5 + $0x50] sm:$0xff]
    %v399 = vld [vmem:[#allocation5 + $0x58] sm:$0xff]
    %v400 = vld [vmem:[#allocation5 + $0x60] sm:$0xff]
    %v401 = vld [vmem:[#allocation5 + $0x68] sm:$0xff]
    %v402 = vld [vmem:[#allocation5 + $0x70] sm:$0xff]
    %v403 = vld [vmem:[#allocation5 + $0x78] sm:$0xff]
    %v404 = vld [vmem:[#allocation5 + $0x80] sm:$0xff]
    %v405 = vld [vmem:[#allocation5 + $0x88] sm:$0xff]
    %v406 = vld [vmem:[#allocation5 + $0x90] sm:$0xff]
    %v407 = vld [vmem:[#allocation5 + $0x98] sm:$0xff]
    %v408 = vld [vmem:[#allocation5 + $0xa0] sm:$0xff]
    %v409 = vld [vmem:[#allocation5 + $0xa8] sm:$0xff]
    %v410 = vld [vmem:[#allocation5 + $0xb0] sm:$0xff]
    %v411 = vld [vmem:[#allocation5 + $0xb8] sm:$0xff]
    %v412 = vld [vmem:[#allocation5 + $0xc0] sm:$0xff]
    %v413 = vld [vmem:[#allocation5 + $0xc8] sm:$0xff]
    %v414 = vld [vmem:[#allocation5 + $0xd0] sm:$0xff]
    %v415 = vld [vmem:[#allocation5 + $0xd8] sm:$0xff]
    %v416 = vld [vmem:[#allocation5 + $0xe0] sm:$0xff]
    %v417 = vld [vmem:[#allocation5 + $0xe8] sm:$0xff]
    %v418 = vld [vmem:[#allocation5 + $0xf0] sm:$0xff]
    %v419 = vld [vmem:[#allocation5 + $0xf8] sm:$0xff]
    %v420 = vld [vmem:[#allocation5 + $0x100] sm:$0xff]
    %v421 = vld [vmem:[#allocation5 + $0x108] sm:$0xff]
    %v422 = vld [vmem:[#allocation5 + $0x110] sm:$0xff]
    %v423 = vld [vmem:[#allocation5 + $0x118] sm:$0xff]
    %v424 = vld [vmem:[#allocation5 + $0x120] sm:$0xff]
    %v425 = vld [vmem:[#allocation5 + $0x128] sm:$0xff]
    %v426 = vld [vmem:[#allocation5 + $0x130] sm:$0xff]
    %v427 = vld [vmem:[#allocation5 + $0x138] sm:$0xff]
    %v428 = vld [vmem:[#allocation5 + $0x140] sm:$0xff]
    %v429 = vld [vmem:[#allocation5 + $0x148] sm:$0xff]
    %v430 = vld [vmem:[#allocation5 + $0x150] sm:$0xff]
    %v431 = vld [vmem:[#allocation5 + $0x158] sm:$0xff]
    %v432 = vld [vmem:[#allocation5 + $0x160] sm:$0xff]
    %v433 = vld [vmem:[#allocation5 + $0x168] sm:$0xff]
    %v434 = vld [vmem:[#allocation5 + $0x170] sm:$0xff]
    %v435 = vld [vmem:[#allocation5 + $0x178] sm:$0xff]
    %v436 = vld [vmem:[#allocation5 + $0x180] sm:$0xff]
    %v437 = vld [vmem:[#allocation5 + $0x188] sm:$0xff]
    %v438 = vld [vmem:[#allocation5 + $0x190] sm:$0xff]
    %v439 = vld [vmem:[#allocation5 + $0x198] sm:$0xff]
    %v440 = vld [vmem:[#allocation5 + $0x1a0] sm:$0xff]
    %v441 = vld [vmem:[#allocation5 + $0x1a8] sm:$0xff]
    %v442 = vld [vmem:[#allocation5 + $0x1b0] sm:$0xff]
    %v443 = vld [vmem:[#allocation5 + $0x1b8] sm:$0xff]
    %v444 = vld [vmem:[#allocation5 + $0x1c0] sm:$0xff]
    %v445 = vld [vmem:[#allocation5 + $0x1c8] sm:$0xff]
    %v446 = vld [vmem:[#allocation5 + $0x1d0] sm:$0xff]
    %v447 = vld [vmem:[#allocation5 + $0x1d8] sm:$0xff]
    %v448 = vld [vmem:[#allocation5 + $0x1e0] sm:$0xff]
    %v449 = vld [vmem:[#allocation5 + $0x1e8] sm:$0xff]
    %v450 = vld [vmem:[#allocation5 + $0x1f0] sm:$0xff]
    %v451 = vld [vmem:[#allocation5 + $0x1f8] sm:$0xff]
    %v452 = vld [vmem:[%s4] sm:$0x3]
    %v454 = vlaneseq
    %v455 = vshrl.u32 %v454, 7
    %v456 = vsub.s32 0, %v455
    %v457 = vrot.slane %v452, %v456
    %v458 = vlaneseq
    %v459 = vshrl.u32 %v458, 7
    %v460 = vsub.s32 1, %v459
    %v461 = vrot.slane %v452, %v460
    %v528 = vunpack.c.l.b16 %v388
    %v529 = vunpack.c.h.b16 %v388
    %v530 = vunpack.c.l.b16 %v389
    %v531 = vunpack.c.h.b16 %v389
    %v532 = vunpack.c.l.b16 %v390
    %v533 = vunpack.c.h.b16 %v390
    %v534 = vunpack.c.l.b16 %v391
    %v535 = vunpack.c.h.b16 %v391
    %v536 = vunpack.c.l.b16 %v392
    %v537 = vunpack.c.h.b16 %v392
    %v538 = vunpack.c.l.b16 %v393
    %v539 = vunpack.c.h.b16 %v393
    %v540 = vunpack.c.l.b16 %v394
    %v541 = vunpack.c.h.b16 %v394
    %v542 = vunpack.c.l.b16 %v395
    %v543 = vunpack.c.h.b16 %v395
    %v544 = vunpack.c.l.b16 %v396
    %v545 = vunpack.c.h.b16 %v396
    %v546 = vunpack.c.l.b16 %v397
    %v547 = vunpack.c.h.b16 %v397
    %v548 = vunpack.c.l.b16 %v398
    %v549 = vunpack.c.h.b16 %v398
    %v550 = vunpack.c.l.b16 %v399
    %v551 = vunpack.c.h.b16 %v399
    %v552 = vunpack.c.l.b16 %v400
    %v553 = vunpack.c.h.b16 %v400
    %v554 = vunpack.c.l.b16 %v401
    %v555 = vunpack.c.h.b16 %v401
    %v556 = vunpack.c.l.b16 %v402
    %v557 = vunpack.c.h.b16 %v402
    %v558 = vunpack.c.l.b16 %v403
    %v559 = vunpack.c.h.b16 %v403
    %v560 = vunpack.c.l.b16 %v404
    %v561 = vunpack.c.h.b16 %v404
    %v562 = vunpack.c.l.b16 %v405
    %v563 = vunpack.c.h.b16 %v405
    %v564 = vunpack.c.l.b16 %v406
    %v565 = vunpack.c.h.b16 %v406
    %v566 = vunpack.c.l.b16 %v407
    %v567 = vunpack.c.h.b16 %v407
    %v568 = vunpack.c.l.b16 %v408
    %v569 = vunpack.c.h.b16 %v408
    %v570 = vunpack.c.l.b16 %v409
    %v571 = vunpack.c.h.b16 %v409
    %v572 = vunpack.c.l.b16 %v410
    %v573 = vunpack.c.h.b16 %v410
    %v574 = vunpack.c.l.b16 %v411
    %v575 = vunpack.c.h.b16 %v411
    %v576 = vunpack.c.l.b16 %v412
    %v577 = vunpack.c.h.b16 %v412
    %v578 = vunpack.c.l.b16 %v413
    %v579 = vunpack.c.h.b16 %v413
    %v580 = vunpack.c.l.b16 %v414
    %v581 = vunpack.c.h.b16 %v414
    %v582 = vunpack.c.l.b16 %v415
    %v583 = vunpack.c.h.b16 %v415
    %v584 = vunpack.c.l.b16 %v416
    %v585 = vunpack.c.h.b16 %v416
    %v586 = vunpack.c.l.b16 %v417
    %v587 = vunpack.c.h.b16 %v417
    %v588 = vunpack.c.l.b16 %v418
    %v589 = vunpack.c.h.b16 %v418
    %v590 = vunpack.c.l.b16 %v419
    %v591 = vunpack.c.h.b16 %v419
    %v592 = vunpack.c.l.b16 %v420
    %v593 = vunpack.c.h.b16 %v420
    %v594 = vunpack.c.l.b16 %v421
    %v595 = vunpack.c.h.b16 %v421
    %v596 = vunpack.c.l.b16 %v422
    %v597 = vunpack.c.h.b16 %v422
    %v598 = vunpack.c.l.b16 %v423
    %v599 = vunpack.c.h.b16 %v423
    %v600 = vunpack.c.l.b16 %v424
    %v601 = vunpack.c.h.b16 %v424
    %v602 = vunpack.c.l.b16 %v425
    %v603 = vunpack.c.h.b16 %v425
    %v604 = vunpack.c.l.b16 %v426
    %v605 = vunpack.c.h.b16 %v426
    %v606 = vunpack.c.l.b16 %v427
    %v607 = vunpack.c.h.b16 %v427
    %v608 = vunpack.c.l.b16 %v428
    %v609 = vunpack.c.h.b16 %v428
    %v610 = vunpack.c.l.b16 %v429
    %v611 = vunpack.c.h.b16 %v429
    %v612 = vunpack.c.l.b16 %v430
    %v613 = vunpack.c.h.b16 %v430
    %v614 = vunpack.c.l.b16 %v431
    %v615 = vunpack.c.h.b16 %v431
    %v616 = vunpack.c.l.b16 %v432
    %v617 = vunpack.c.h.b16 %v432
    %v618 = vunpack.c.l.b16 %v433
    %v619 = vunpack.c.h.b16 %v433
    %v620 = vunpack.c.l.b16 %v434
    %v621 = vunpack.c.h.b16 %v434
    %v622 = vunpack.c.l.b16 %v435
    %v623 = vunpack.c.h.b16 %v435
    %v624 = vunpack.c.l.b16 %v436
    %v625 = vunpack.c.h.b16 %v436
    %v626 = vunpack.c.l.b16 %v437
    %v627 = vunpack.c.h.b16 %v437
    %v628 = vunpack.c.l.b16 %v438
    %v629 = vunpack.c.h.b16 %v438
    %v630 = vunpack.c.l.b16 %v439
    %v631 = vunpack.c.h.b16 %v439
    %v632 = vunpack.c.l.b16 %v440
    %v633 = vunpack.c.h.b16 %v440
    %v634 = vunpack.c.l.b16 %v441
    %v635 = vunpack.c.h.b16 %v441
    %v636 = vunpack.c.l.b16 %v442
    %v637 = vunpack.c.h.b16 %v442
    %v638 = vunpack.c.l.b16 %v443
    %v639 = vunpack.c.h.b16 %v443
    %v640 = vunpack.c.l.b16 %v444
    %v641 = vunpack.c.h.b16 %v444
    %v642 = vunpack.c.l.b16 %v445
    %v643 = vunpack.c.h.b16 %v445
    %v644 = vunpack.c.l.b16 %v446
    %v645 = vunpack.c.h.b16 %v446
    %v646 = vunpack.c.l.b16 %v447
    %v647 = vunpack.c.h.b16 %v447
    %v648 = vunpack.c.l.b16 %v448
    %v649 = vunpack.c.h.b16 %v448
    %v650 = vunpack.c.l.b16 %v449
    %v651 = vunpack.c.h.b16 %v449
    %v652 = vunpack.c.l.b16 %v450
    %v653 = vunpack.c.h.b16 %v450
    %v654 = vunpack.c.l.b16 %v451
    %v655 = vunpack.c.h.b16 %v451
    %v656 = vpack.c.b16 %v530, %v528
    %v657 = vpack.c.b16 %v531, %v529
    %v658 = vpack.c.b16 %v534, %v532
    %v659 = vpack.c.b16 %v535, %v533
    %v660 = vpack.c.b16 %v538, %v536
    %v661 = vpack.c.b16 %v539, %v537
    %v662 = vpack.c.b16 %v542, %v540
    %v663 = vpack.c.b16 %v543, %v541
    %v664 = vpack.c.b16 %v546, %v544
    %v665 = vpack.c.b16 %v547, %v545
    %v666 = vpack.c.b16 %v550, %v548
    %v667 = vpack.c.b16 %v551, %v549
    %v668 = vpack.c.b16 %v554, %v552
    %v669 = vpack.c.b16 %v555, %v553
    %v670 = vpack.c.b16 %v558, %v556
    %v671 = vpack.c.b16 %v559, %v557
    %v672 = vpack.c.b16 %v562, %v560
    %v673 = vpack.c.b16 %v563, %v561
    %v674 = vpack.c.b16 %v566, %v564
    %v675 = vpack.c.b16 %v567, %v565
    %v676 = vpack.c.b16 %v570, %v568
    %v677 = vpack.c.b16 %v571, %v569
    %v678 = vpack.c.b16 %v574, %v572
    %v679 = vpack.c.b16 %v575, %v573
    %v680 = vpack.c.b16 %v578, %v576
    %v681 = vpack.c.b16 %v579, %v577
    %v682 = vpack.c.b16 %v582, %v580
    %v683 = vpack.c.b16 %v583, %v581
    %v684 = vpack.c.b16 %v586, %v584
    %v685 = vpack.c.b16 %v587, %v585
    %v686 = vpack.c.b16 %v590, %v588
    %v687 = vpack.c.b16 %v591, %v589
    %v688 = vpack.c.b16 %v594, %v592
    %v689 = vpack.c.b16 %v595, %v593
    %v690 = vpack.c.b16 %v598, %v596
    %v691 = vpack.c.b16 %v599, %v597
    %v692 = vpack.c.b16 %v602, %v600
    %v693 = vpack.c.b16 %v603, %v601
    %v694 = vpack.c.b16 %v606, %v604
    %v695 = vpack.c.b16 %v607, %v605
    %v696 = vpack.c.b16 %v610, %v608
    %v697 = vpack.c.b16 %v611, %v609
    %v698 = vpack.c.b16 %v614, %v612
    %v699 = vpack.c.b16 %v615, %v613
    %v700 = vpack.c.b16 %v618, %v616
    %v701 = vpack.c.b16 %v619, %v617
    %v702 = vpack.c.b16 %v622, %v620
    %v703 = vpack.c.b16 %v623, %v621
    %v704 = vpack.c.b16 %v626, %v624
    %v705 = vpack.c.b16 %v627, %v625
    %v706 = vpack.c.b16 %v630, %v628
    %v707 = vpack.c.b16 %v631, %v629
    %v708 = vpack.c.b16 %v634, %v632
    %v709 = vpack.c.b16 %v635, %v633
    %v710 = vpack.c.b16 %v638, %v636
    %v711 = vpack.c.b16 %v639, %v637
    %v712 = vpack.c.b16 %v642, %v640
    %v713 = vpack.c.b16 %v643, %v641
    %v714 = vpack.c.b16 %v646, %v644
    %v715 = vpack.c.b16 %v647, %v645
    %v716 = vpack.c.b16 %v650, %v648
    %v717 = vpack.c.b16 %v651, %v649
    %v718 = vpack.c.b16 %v654, %v652
    %v719 = vpack.c.b16 %v655, %v653
    %784 = vmatprep.subr.bf16.mxu0 %v657
    %785 = vmatpush1.bf16.msra.mxu0 %v656
    %786 = vmatprep.subr.bf16.mxu0 %v659
    %787 = vmatpush1.bf16.msra.mxu0 %v658
    %788 = vmatprep.subr.bf16.mxu0 %v661
    %789 = vmatpush1.bf16.msra.mxu0 %v660
    %790 = vmatprep.subr.bf16.mxu0 %v663
    %791 = vmatpush1.bf16.msra.mxu0 %v662
    %792 = vmatprep.subr.bf16.mxu0 %v665
    %793 = vmatpush1.bf16.msra.mxu0 %v664
    %794 = vmatprep.subr.bf16.mxu0 %v667
    %795 = vmatpush1.bf16.msra.mxu0 %v666
    %796 = vmatprep.subr.bf16.mxu0 %v669
    %797 = vmatpush1.bf16.msra.mxu0 %v668
    %798 = vmatprep.subr.bf16.mxu0 %v671
    %799 = vmatpush1.bf16.msra.mxu0 %v670
    %800 = vmatprep.subr.bf16.mxu0 %v673
    %801 = vmatpush1.bf16.msra.mxu0 %v672
    %802 = vmatprep.subr.bf16.mxu0 %v675
    %803 = vmatpush1.bf16.msra.mxu0 %v674
    %804 = vmatprep.subr.bf16.mxu0 %v677
    %805 = vmatpush1.bf16.msra.mxu0 %v676
    %806 = vmatprep.subr.bf16.mxu0 %v679
    %807 = vmatpush1.bf16.msra.mxu0 %v678
    %808 = vmatprep.subr.bf16.mxu0 %v681
    %809 = vmatpush1.bf16.msra.mxu0 %v680
    %810 = vmatprep.subr.bf16.mxu0 %v683
    %811 = vmatpush1.bf16.msra.mxu0 %v682
    %812 = vmatprep.subr.bf16.mxu0 %v685
    %813 = vmatpush1.bf16.msra.mxu0 %v684
    %814 = vmatprep.subr.bf16.mxu0 %v687
    %815 = vmatpush1.bf16.msra.mxu0 %v686
    %816 = vmatprep.mubr.bf16.mxu0 %v385
    %817 = vmatmul.mubr.bf16.gmra.mrb[0].mxu0 %v384
    %v818 = vpop.f32.mrb[0].mxu0
    %v819 = vadd.f32 %v457, %v818
    %v820 = vpop.f32.mrb[0].mxu0
    %v821 = vadd.f32 %v461, %v820
    %v822 = vpop.f32.mrb[0].mxu0
    %v823 = vpop.f32.mrb[0].mxu0
    %824 = vdwg.mxu0
    %825 = vmatprep.subr.bf16.mxu0 %v689
    %826 = vmatpush1.bf16.msra.mxu0 %v688
    %827 = vmatprep.subr.bf16.mxu0 %v691
    %828 = vmatpush1.bf16.msra.mxu0 %v690
    %829 = vmatprep.subr.bf16.mxu0 %v693
    %830 = vmatpush1.bf16.msra.mxu0 %v692
    %831 = vmatprep.subr.bf16.mxu0 %v695
    %832 = vmatpush1.bf16.msra.mxu0 %v694
    %833 = vmatprep.subr.bf16.mxu0 %v697
    %834 = vmatpush1.bf16.msra.mxu0 %v696
    %835 = vmatprep.subr.bf16.mxu0 %v699
    %836 = vmatpush1.bf16.msra.mxu0 %v698
    %837 = vmatprep.subr.bf16.mxu0 %v701
    %838 = vmatpush1.bf16.msra.mxu0 %v700
    %839 = vmatprep.subr.bf16.mxu0 %v703
    %840 = vmatpush1.bf16.msra.mxu0 %v702
    %841 = vmatprep.subr.bf16.mxu0 %v705
    %842 = vmatpush1.bf16.msra.mxu0 %v704
    %843 = vmatprep.subr.bf16.mxu0 %v707
    %844 = vmatpush1.bf16.msra.mxu0 %v706
    %845 = vmatprep.subr.bf16.mxu0 %v709
    %846 = vmatpush1.bf16.msra.mxu0 %v708
    %847 = vmatprep.subr.bf16.mxu0 %v711
    %848 = vmatpush1.bf16.msra.mxu0 %v710
    %849 = vmatprep.subr.bf16.mxu0 %v713
    %850 = vmatpush1.bf16.msra.mxu0 %v712
    %851 = vmatprep.subr.bf16.mxu0 %v715
    %852 = vmatpush1.bf16.msra.mxu0 %v714
    %853 = vmatprep.subr.bf16.mxu0 %v717
    %854 = vmatpush1.bf16.msra.mxu0 %v716
    %855 = vmatprep.subr.bf16.mxu0 %v719
    %856 = vmatpush1.bf16.msra.mxu0 %v718
    %857 = vmatprep.mubr.bf16.mxu0 %v387
    %858 = vmatmul.mubr.bf16.gmra.mrb[0].mxu0 %v386
    %v859 = vpop.f32.mrb[0].mxu0
    %v860 = vadd.f32 %v819, %v859
    %v861 = vpop.f32.mrb[0].mxu0
    %v862 = vadd.f32 %v821, %v861
    %v863 = vpop.f32.mrb[0].mxu0
    %v864 = vpop.f32.mrb[0].mxu0
    %865 = vdwg.mxu0
    %v866 = vtanh.pop %v860
    %v867 = vtanh.pop %v862
    %v868 = vpack.c.bf16 %v866, %v866
    %v869 = vpack.c.bf16 %v867, %v867
    %v870 = vld [vmem:[#allocation7] sm:$0xff]
    %v871 = vld [vmem:[#allocation7 + $0x8] sm:$0xff]
    %v872 = vld [vmem:[#allocation7 + $0x10] sm:$0xff]
    %v873 = vld [vmem:[#allocation7 + $0x18] sm:$0xff]
    %v874 = vld [vmem:[#allocation7 + $0x20] sm:$0xff]
    %v875 = vld [vmem:[#allocation7 + $0x28] sm:$0xff]
    %v876 = vld [vmem:[#allocation7 + $0x30] sm:$0xff]
    %v877 = vld [vmem:[#allocation7 + $0x38] sm:$0xff]
    %v878 = vld [vmem:[#allocation7 + $0x40] sm:$0xff]
    %v879 = vld [vmem:[#allocation7 + $0x48] sm:$0xff]
    %v880 = vld [vmem:[#allocation7 + $0x50] sm:$0xff]
    %v881 = vld [vmem:[#allocation7 + $0x58] sm:$0xff]
    %v882 = vld [vmem:[#allocation7 + $0x60] sm:$0xff]
    %v883 = vld [vmem:[#allocation7 + $0x68] sm:$0xff]
    %v884 = vld [vmem:[#allocation7 + $0x70] sm:$0xff]
    %v885 = vld [vmem:[#allocation7 + $0x78] sm:$0xff]
    %v886 = vld [vmem:[#allocation7 + $0x80] sm:$0xff]
    %v887 = vld [vmem:[#allocation7 + $0x88] sm:$0xff]
    %v888 = vld [vmem:[#allocation7 + $0x90] sm:$0xff]
    %v889 = vld [vmem:[#allocation7 + $0x98] sm:$0xff]
    %v890 = vld [vmem:[#allocation7 + $0xa0] sm:$0xff]
    %v891 = vld [vmem:[#allocation7 + $0xa8] sm:$0xff]
    %v892 = vld [vmem:[#allocation7 + $0xb0] sm:$0xff]
    %v893 = vld [vmem:[#allocation7 + $0xb8] sm:$0xff]
    %v894 = vld [vmem:[#allocation7 + $0xc0] sm:$0xff]
    %v895 = vld [vmem:[#allocation7 + $0xc8] sm:$0xff]
    %v896 = vld [vmem:[#allocation7 + $0xd0] sm:$0xff]
    %v897 = vld [vmem:[#allocation7 + $0xd8] sm:$0xff]
    %v898 = vld [vmem:[#allocation7 + $0xe0] sm:$0xff]
    %v899 = vld [vmem:[#allocation7 + $0xe8] sm:$0xff]
    %v900 = vld [vmem:[#allocation7 + $0xf0] sm:$0xff]
    %v901 = vld [vmem:[#allocation7 + $0xf8] sm:$0xff]
    %v902 = vld [vmem:[%s6] sm:$0x3]
    %v904 = vlaneseq
    %v905 = vshrl.u32 %v904, 7
    %v906 = vsub.s32 0, %v905
    %v907 = vrot.slane %v902, %v906
    %v908 = vlaneseq
    %v909 = vshrl.u32 %v908, 7
    %v910 = vsub.s32 1, %v909
    %v911 = vrot.slane %v902, %v910
    %v946 = vunpack.c.l.b16 %v870
    %v947 = vunpack.c.h.b16 %v870
    %v948 = vunpack.c.l.b16 %v871
    %v949 = vunpack.c.h.b16 %v871
    %v950 = vunpack.c.l.b16 %v872
    %v951 = vunpack.c.h.b16 %v872
    %v952 = vunpack.c.l.b16 %v873
    %v953 = vunpack.c.h.b16 %v873
    %v954 = vunpack.c.l.b16 %v874
    %v955 = vunpack.c.h.b16 %v874
    %v956 = vunpack.c.l.b16 %v875
    %v957 = vunpack.c.h.b16 %v875
    %v958 = vunpack.c.l.b16 %v876
    %v959 = vunpack.c.h.b16 %v876
    %v960 = vunpack.c.l.b16 %v877
    %v961 = vunpack.c.h.b16 %v877
    %v962 = vunpack.c.l.b16 %v878
    %v963 = vunpack.c.h.b16 %v878
    %v964 = vunpack.c.l.b16 %v879
    %v965 = vunpack.c.h.b16 %v879
    %v966 = vunpack.c.l.b16 %v880
    %v967 = vunpack.c.h.b16 %v880
    %v968 = vunpack.c.l.b16 %v881
    %v969 = vunpack.c.h.b16 %v881
    %v970 = vunpack.c.l.b16 %v882
    %v971 = vunpack.c.h.b16 %v882
    %v972 = vunpack.c.l.b16 %v883
    %v973 = vunpack.c.h.b16 %v883
    %v974 = vunpack.c.l.b16 %v884
    %v975 = vunpack.c.h.b16 %v884
    %v976 = vunpack.c.l.b16 %v885
    %v977 = vunpack.c.h.b16 %v885
    %v978 = vunpack.c.l.b16 %v886
    %v979 = vunpack.c.h.b16 %v886
    %v980 = vunpack.c.l.b16 %v887
    %v981 = vunpack.c.h.b16 %v887
    %v982 = vunpack.c.l.b16 %v888
    %v983 = vunpack.c.h.b16 %v888
    %v984 = vunpack.c.l.b16 %v889
    %v985 = vunpack.c.h.b16 %v889
    %v986 = vunpack.c.l.b16 %v890
    %v987 = vunpack.c.h.b16 %v890
    %v988 = vunpack.c.l.b16 %v891
    %v989 = vunpack.c.h.b16 %v891
    %v990 = vunpack.c.l.b16 %v892
    %v991 = vunpack.c.h.b16 %v892
    %v992 = vunpack.c.l.b16 %v893
    %v993 = vunpack.c.h.b16 %v893
    %v994 = vunpack.c.l.b16 %v894
    %v995 = vunpack.c.h.b16 %v894
    %v996 = vunpack.c.l.b16 %v895
    %v997 = vunpack.c.h.b16 %v895
    %v998 = vunpack.c.l.b16 %v896
    %v999 = vunpack.c.h.b16 %v896
    %v1000 = vunpack.c.l.b16 %v897
    %v1001 = vunpack.c.h.b16 %v897
    %v1002 = vunpack.c.l.b16 %v898
    %v1003 = vunpack.c.h.b16 %v898
    %v1004 = vunpack.c.l.b16 %v899
    %v1005 = vunpack.c.h.b16 %v899
    %v1006 = vunpack.c.l.b16 %v900
    %v1007 = vunpack.c.h.b16 %v900
    %v1008 = vunpack.c.l.b16 %v901
    %v1009 = vunpack.c.h.b16 %v901
    %v1010 = vpack.c.b16 %v948, %v946
    %v1011 = vpack.c.b16 %v949, %v947
    %v1012 = vpack.c.b16 %v952, %v950
    %v1013 = vpack.c.b16 %v953, %v951
    %v1014 = vpack.c.b16 %v956, %v954
    %v1015 = vpack.c.b16 %v957, %v955
    %v1016 = vpack.c.b16 %v960, %v958
    %v1017 = vpack.c.b16 %v961, %v959
    %v1018 = vpack.c.b16 %v964, %v962
    %v1019 = vpack.c.b16 %v965, %v963
    %v1020 = vpack.c.b16 %v968, %v966
    %v1021 = vpack.c.b16 %v969, %v967
    %v1022 = vpack.c.b16 %v972, %v970
    %v1023 = vpack.c.b16 %v973, %v971
    %v1024 = vpack.c.b16 %v976, %v974
    %v1025 = vpack.c.b16 %v977, %v975
    %v1026 = vpack.c.b16 %v980, %v978
    %v1027 = vpack.c.b16 %v981, %v979
    %v1028 = vpack.c.b16 %v984, %v982
    %v1029 = vpack.c.b16 %v985, %v983
    %v1030 = vpack.c.b16 %v988, %v986
    %v1031 = vpack.c.b16 %v989, %v987
    %v1032 = vpack.c.b16 %v992, %v990
    %v1033 = vpack.c.b16 %v993, %v991
    %v1034 = vpack.c.b16 %v996, %v994
    %v1035 = vpack.c.b16 %v997, %v995
    %v1036 = vpack.c.b16 %v1000, %v998
    %v1037 = vpack.c.b16 %v1001, %v999
    %v1038 = vpack.c.b16 %v1004, %v1002
    %v1039 = vpack.c.b16 %v1005, %v1003
    %v1040 = vpack.c.b16 %v1008, %v1006
    %v1041 = vpack.c.b16 %v1009, %v1007
    %1074 = vmatprep.subr.bf16.mxu0 %v1011
    %1075 = vmatpush1.bf16.msra.mxu0 %v1010
    %1076 = vmatprep.subr.bf16.mxu0 %v1013
    %1077 = vmatpush1.bf16.msra.mxu0 %v1012
    %1078 = vmatprep.subr.bf16.mxu0 %v1015
    %1079 = vmatpush1.bf16.msra.mxu0 %v1014
    %1080 = vmatprep.subr.bf16.mxu0 %v1017
    %1081 = vmatpush1.bf16.msra.mxu0 %v1016
    %1082 = vmatprep.subr.bf16.mxu0 %v1019
    %1083 = vmatpush1.bf16.msra.mxu0 %v1018
    %1084 = vmatprep.subr.bf16.mxu0 %v1021
    %1085 = vmatpush1.bf16.msra.mxu0 %v1020
    %1086 = vmatprep.subr.bf16.mxu0 %v1023
    %1087 = vmatpush1.bf16.msra.mxu0 %v1022
    %1088 = vmatprep.subr.bf16.mxu0 %v1025
    %1089 = vmatpush1.bf16.msra.mxu0 %v1024
    %1090 = vmatprep.subr.bf16.mxu0 %v1027
    %1091 = vmatpush1.bf16.msra.mxu0 %v1026
    %1092 = vmatprep.subr.bf16.mxu0 %v1029
    %1093 = vmatpush1.bf16.msra.mxu0 %v1028
    %1094 = vmatprep.subr.bf16.mxu0 %v1031
    %1095 = vmatpush1.bf16.msra.mxu0 %v1030
    %1096 = vmatprep.subr.bf16.mxu0 %v1033
    %1097 = vmatpush1.bf16.msra.mxu0 %v1032
    %1098 = vmatprep.subr.bf16.mxu0 %v1035
    %1099 = vmatpush1.bf16.msra.mxu0 %v1034
    %1100 = vmatprep.subr.bf16.mxu0 %v1037
    %1101 = vmatpush1.bf16.msra.mxu0 %v1036
    %1102 = vmatprep.subr.bf16.mxu0 %v1039
    %1103 = vmatpush1.bf16.msra.mxu0 %v1038
    %1104 = vmatprep.subr.bf16.mxu0 %v1041
    %1105 = vmatpush1.bf16.msra.mxu0 %v1040
    %1106 = vmatprep.mubr.bf16.mxu0 %v869
    %1107 = vmatmul.mubr.bf16.gmra.mrb[0].mxu0 %v868
    %v1108 = vpop.f32.mrb[0].mxu0
    %v1109 = vadd.f32 %v907, %v1108
    %v1110 = vpop.f32.mrb[0].mxu0
    %v1111 = vadd.f32 %v911, %v1110
    %v1112 = vpop.f32.mrb[0].mxu0
    %v1113 = vpop.f32.mrb[0].mxu0
    %1114 = vdwg.mxu0
    %v1115 = vtanh.pop %v1109
    %v1116 = vtanh.pop %v1111
    %v1117 = vpack.c.bf16 %v1115, %v1115
    %v1118 = vld [vmem:[%s7] sm:$0xf]
    %v1119 = vld [vmem:[%s7 + $0x4] sm:$0xf]
    %v1120 = vld [vmem:[%s7 + $0x8] sm:$0xf]
    %v1121 = vld [vmem:[%s7 + $0xc] sm:$0xf]
    %v1122 = vld [vmem:[%s7 + $0x10] sm:$0xf]
    %v1123 = vld [vmem:[%s7 + $0x14] sm:$0xf]
    %v1124 = vld [vmem:[%s7 + $0x18] sm:$0xf]
    %v1125 = vld [vmem:[%s7 + $0x1c] sm:$0xf]
    %v1126 = vld [vmem:[%s7 + $0x20] sm:$0xf]
    %v1127 = vld [vmem:[%s7 + $0x24] sm:$0xf]
    %v1128 = vld [vmem:[%s7 + $0x28] sm:$0xf]
    %v1129 = vld [vmem:[%s7 + $0x2c] sm:$0xf]
    %v1130 = vld [vmem:[%s7 + $0x30] sm:$0xf]
    %v1131 = vld [vmem:[%s7 + $0x34] sm:$0xf]
    %v1132 = vld [vmem:[%s7 + $0x38] sm:$0xf]
    %v1133 = vld [vmem:[%s7 + $0x3c] sm:$0xf]
    %v1134 = vld [vmem:[%s8] sm:$0x1]
    %v1136 = vlaneseq
    %v1137 = vshrl.u32 %v1136, 7
    %v1138 = vsub.s32 0, %v1137
    %v1139 = vrot.slane %v1134, %v1138
    %v1157 = vunpack.c.l.b16 %v1118
    %v1158 = vunpack.c.l.b16 %v1119
    %v1159 = vunpack.c.l.b16 %v1120
    %v1160 = vunpack.c.l.b16 %v1121
    %v1161 = vunpack.c.l.b16 %v1122
    %v1162 = vunpack.c.l.b16 %v1123
    %v1163 = vunpack.c.l.b16 %v1124
    %v1164 = vunpack.c.l.b16 %v1125
    %v1165 = vunpack.c.l.b16 %v1126
    %v1166 = vunpack.c.l.b16 %v1127
    %v1167 = vunpack.c.l.b16 %v1128
    %v1168 = vunpack.c.l.b16 %v1129
    %v1169 = vunpack.c.l.b16 %v1130
    %v1170 = vunpack.c.l.b16 %v1131
    %v1171 = vunpack.c.l.b16 %v1132
    %v1172 = vunpack.c.l.b16 %v1133
    %v1173 = vpack.c.b16 %v1158, %v1157
    %v1174 = vpack.c.b16 %v1160, %v1159
    %v1175 = vpack.c.b16 %v1162, %v1161
    %v1176 = vpack.c.b16 %v1164, %v1163
    %v1177 = vpack.c.b16 %v1166, %v1165
    %v1178 = vpack.c.b16 %v1168, %v1167
    %v1179 = vpack.c.b16 %v1170, %v1169
    %v1180 = vpack.c.b16 %v1172, %v1171
    %1189 = vmatprep.subr.bf16.mxu0 0
    %1190 = vmatpush1.bf16.msra.mxu0 %v1173
    %1191 = vmatprep.subr.bf16.mxu0 0
    %1192 = vmatpush1.bf16.msra.mxu0 %v1174
    %1193 = vmatprep.subr.bf16.mxu0 0
    %1194 = vmatpush1.bf16.msra.mxu0 %v1175
    %1195 = vmatprep.subr.bf16.mxu0 0
    %1196 = vmatpush1.bf16.msra.mxu0 %v1176
    %1197 = vmatprep.subr.bf16.mxu0 0
    %1198 = vmatpush1.bf16.msra.mxu0 %v1177
    %1199 = vmatprep.subr.bf16.mxu0 0
    %1200 = vmatpush1.bf16.msra.mxu0 %v1178
    %1201 = vmatprep.subr.bf16.mxu0 0
    %1202 = vmatpush1.bf16.msra.mxu0 %v1179
    %1203 = vmatprep.subr.bf16.mxu0 0
    %1204 = vmatpush1.bf16.msra.mxu0 %v1180
    %1205 = vmatprep.subr.bf16.mxu0 0
    %1206 = vmatpush1.bf16.msra.mxu0 0
    %1207 = vmatprep.subr.bf16.mxu0 0
    %1208 = vmatpush1.bf16.msra.mxu0 0
    %1209 = vmatprep.subr.bf16.mxu0 0
    %1210 = vmatpush1.bf16.msra.mxu0 0
    %1211 = vmatprep.subr.bf16.mxu0 0
    %1212 = vmatpush1.bf16.msra.mxu0 0
    %1213 = vmatprep.subr.bf16.mxu0 0
    %1214 = vmatpush1.bf16.msra.mxu0 0
    %1215 = vmatprep.subr.bf16.mxu0 0
    %1216 = vmatpush1.bf16.msra.mxu0 0
    %1217 = vmatprep.subr.bf16.mxu0 0
    %1218 = vmatpush1.bf16.msra.mxu0 0
    %1219 = vmatprep.subr.bf16.mxu0 0
    %1220 = vmatpush1.bf16.msra.mxu0 0
    %1221 = vmatprep.mubr.bf16.mxu0 0
    %1222 = vmatmul.mubr.bf16.gmra.mrb[0].mxu0 %v1117
    %v1223 = vpop.f32.mrb[0].mxu0
    %v1224 = vadd.f32 %v1139, %v1223
    %v1225 = vpop.f32.mrb[0].mxu0
    %v1226 = vpop.f32.mrb[0].mxu0
    %v1227 = vpop.f32.mrb[0].mxu0
    %1228 = vdwg.mxu0
    %v1229 = vtanh.pop %v1224
    %vm1230 = vcmask 31744
    %1231 = vst.msk [vmem:[%s11] sm:$0xff] %vm1230, %v1229
    %v1232 = vpack.c.bf16 %v1116, %v1116
    %v1233 = vld [vmem:[%s9] sm:$0xf]
    %v1234 = vld [vmem:[%s9 + $0x4] sm:$0xf]
    %v1235 = vld [vmem:[%s9 + $0x8] sm:$0xf]
    %v1236 = vld [vmem:[%s9 + $0xc] sm:$0xf]
    %v1237 = vld [vmem:[%s9 + $0x10] sm:$0xf]
    %v1238 = vld [vmem:[%s9 + $0x14] sm:$0xf]
    %v1239 = vld [vmem:[%s9 + $0x18] sm:$0xf]
    %v1240 = vld [vmem:[%s9 + $0x1c] sm:$0xf]
    %v1241 = vld [vmem:[%s9 + $0x20] sm:$0xf]
    %v1242 = vld [vmem:[%s9 + $0x24] sm:$0xf]
    %v1243 = vld [vmem:[%s9 + $0x28] sm:$0xf]
    %v1244 = vld [vmem:[%s9 + $0x2c] sm:$0xf]
    %v1245 = vld [vmem:[%s9 + $0x30] sm:$0xf]
    %v1246 = vld [vmem:[%s9 + $0x34] sm:$0xf]
    %v1247 = vld [vmem:[%s9 + $0x38] sm:$0xf]
    %v1248 = vld [vmem:[%s9 + $0x3c] sm:$0xf]
    %v1249 = vld [vmem:[%s10] sm:$0x1]
    %v1251 = vlaneseq
    %v1252 = vshrl.u32 %v1251, 7
    %v1253 = vsub.s32 0, %v1252
    %v1254 = vrot.slane %v1249, %v1253
    %v1272 = vunpack.c.l.b16 %v1233
    %v1273 = vunpack.c.l.b16 %v1234
    %v1274 = vunpack.c.l.b16 %v1235
    %v1275 = vunpack.c.l.b16 %v1236
    %v1276 = vunpack.c.l.b16 %v1237
    %v1277 = vunpack.c.l.b16 %v1238
    %v1278 = vunpack.c.l.b16 %v1239
    %v1279 = vunpack.c.l.b16 %v1240
    %v1280 = vunpack.c.l.b16 %v1241
    %v1281 = vunpack.c.l.b16 %v1242
    %v1282 = vunpack.c.l.b16 %v1243
    %v1283 = vunpack.c.l.b16 %v1244
    %v1284 = vunpack.c.l.b16 %v1245
    %v1285 = vunpack.c.l.b16 %v1246
    %v1286 = vunpack.c.l.b16 %v1247
    %v1287 = vunpack.c.l.b16 %v1248
    %v1288 = vpack.c.b16 %v1273, %v1272
    %v1289 = vpack.c.b16 %v1275, %v1274
    %v1290 = vpack.c.b16 %v1277, %v1276
    %v1291 = vpack.c.b16 %v1279, %v1278
    %v1292 = vpack.c.b16 %v1281, %v1280
    %v1293 = vpack.c.b16 %v1283, %v1282
    %v1294 = vpack.c.b16 %v1285, %v1284
    %v1295 = vpack.c.b16 %v1287, %v1286
    %1304 = vmatprep.subr.bf16.mxu0 0
    %1305 = vmatpush1.bf16.msra.mxu0 %v1288
    %1306 = vmatprep.subr.bf16.mxu0 0
    %1307 = vmatpush1.bf16.msra.mxu0 %v1289
    %1308 = vmatprep.subr.bf16.mxu0 0
    %1309 = vmatpush1.bf16.msra.mxu0 %v1290
    %1310 = vmatprep.subr.bf16.mxu0 0
    %1311 = vmatpush1.bf16.msra.mxu0 %v1291
    %1312 = vmatprep.subr.bf16.mxu0 0
    %1313 = vmatpush1.bf16.msra.mxu0 %v1292
    %1314 = vmatprep.subr.bf16.mxu0 0
    %1315 = vmatpush1.bf16.msra.mxu0 %v1293
    %1316 = vmatprep.subr.bf16.mxu0 0
    %1317 = vmatpush1.bf16.msra.mxu0 %v1294
    %1318 = vmatprep.subr.bf16.mxu0 0
    %1319 = vmatpush1.bf16.msra.mxu0 %v1295
    %1320 = vmatprep.subr.bf16.mxu0 0
    %1321 = vmatpush1.bf16.msra.mxu0 0
    %1322 = vmatprep.subr.bf16.mxu0 0
    %1323 = vmatpush1.bf16.msra.mxu0 0
    %1324 = vmatprep.subr.bf16.mxu0 0
    %1325 = vmatpush1.bf16.msra.mxu0 0
    %1326 = vmatprep.subr.bf16.mxu0 0
    %1327 = vmatpush1.bf16.msra.mxu0 0
    %1328 = vmatprep.subr.bf16.mxu0 0
    %1329 = vmatpush1.bf16.msra.mxu0 0
    %1330 = vmatprep.subr.bf16.mxu0 0
    %1331 = vmatpush1.bf16.msra.mxu0 0
    %1332 = vmatprep.subr.bf16.mxu0 0
    %1333 = vmatpush1.bf16.msra.mxu0 0
    %1334 = vmatprep.subr.bf16.mxu0 0
    %1335 = vmatpush1.bf16.msra.mxu0 0
    %1336 = vmatprep.mubr.bf16.mxu0 0
    %1337 = vmatmul.mubr.bf16.gmra.mrb[0].mxu0 %v1232
    %v1338 = vpop.f32.mrb[0].mxu0
    %v1339 = vadd.f32 %v1254, %v1338
    %v1340 = vpop.f32.mrb[0].mxu0
    %v1341 = vpop.f32.mrb[0].mxu0
    %v1342 = vpop.f32.mrb[0].mxu0
    %1343 = vdwg.mxu0
    %vm1344 = vcmask 64512
    %v1345 = vsel %vm1344, %v1339, -inf
    %1346 = vmax.xlane.f32.xlu0 %v1345
    %v1347 = vpop.xlane.xlu0 %1346
    %v1348 = vsub.f32 %v1339, %v1347
    %v1349 = vmul.f32 %v1348, 1.442695
    %v1350 = vpow.pop %v1349
    %v1351 = vsel %vm1344, %v1350, 0.0
    %1352 = vadd.xlane.f32.xlu0 %v1351
    %v1353 = vpop.xlane.xlu0 %1352
    %v1354 = vrcp.pop %v1353
    %v1355 = vmul.f32 %v1350, %v1354
    %vm1356 = vcmask 195648
    %v1357 = vsel %vm1356, %v1339, -inf
    %1358 = vmax.xlane.f32.xlu0 %v1357
    %v1359 = vpop.xlane.xlu0 %1358
    %v1360 = vsub.f32 %v1339, %v1359
    %v1361 = vmul.f32 %v1360, 1.442695
    %v1362 = vpow.pop %v1361
    %1364 = vrot.lane.b32.xlu0 %v1362, 120
    %v1365 = vpop.permute.xlu0 %1364
    %vm1367 = vcmask 130048
    %v1368 = vsel %vm1367, %v1365, 0.0
    %1369 = vadd.xlane.f32.xlu0 %v1368
    %v1370 = vpop.xlane.xlu0 %1369
    %v1371 = vrcp.pop %v1370
    %v1372 = vmul.f32 %v1362, %v1371
    %v1373 = vsel %vm1344, %v1355, %v1372
    %vm1374 = vcmask 195584
    %1375 = vst.msk [vmem:[#allocation8] sm:$0xff] %vm1374, %v1373
    // Predicated region
    $region58: #{tpu_custom_call.1} parent=1 // pred_check
      _
    $region59: #{tpu_custom_call.1} parent=1 // pred_check_branch
      %1377 = sbr.rel (0) target = $region61
    $region60: #{tpu_custom_call.1} parent=1 // pred_region
      _
    $region61: #{tpu_custom_call.1} parent=1 // pred_fallthru
      _
    // Predicated region
    $region62: #{tpu_custom_call.1} parent=1 // pred_check
      _
    $region63: #{tpu_custom_call.1} parent=1 // pred_check_branch
      %1379 = sbr.rel (0) target = $region65
    $region64: #{tpu_custom_call.1} parent=1 // pred_region
      %s1381 = ssub.s32 128, 128
      %1382 = vsyncadd [#allocation4], %s1381
      %s1384 = sshll.u32 [#allocation8], 4
      %s1385 = int_to_ptr.vmem [resolvable:$true] %s1384
      %1387 = dma.vmem_to_hbm [thread:$0]  %s1385, 128, %s12, [#allocation4]
    $region65: #{tpu_custom_call.1} parent=1 // pred_fallthru
      _
    // Predicated region
    $region66: #{tpu_custom_call.1} parent=1 // pred_check
      _
    $region67: #{tpu_custom_call.1} parent=1 // pred_check_branch
      %1389 = sbr.rel (0) target = $region69
    $region68: #{tpu_custom_call.1} parent=1 // pred_region
      _
    $region69: #{tpu_custom_call.1} parent=1 // pred_fallthru
      _
    // Predicated region
    $region70: #{tpu_custom_call.1} parent=1 // pred_check
      _
    $region71: #{tpu_custom_call.1} parent=1 // pred_check_branch
      %1391 = sbr.rel (0) target = $region73
    $region72: #{tpu_custom_call.1} parent=1 // pred_region
      %1392 = dma.done [#allocation4], 128
    $region73: #{tpu_custom_call.1} parent=1 // pred_fallthru
      _
    %1393 = vsyncpa [#allocation3], 1
    %1394 = vsyncpa [#allocation6], 1
    %1395 = vsyncpa [#allocation4], 1

</llo_original>
